<compile_context>
chip_gen: v7x
topology: tpu7x:2x2x1
jax: 0.10.0
libtpu: 0.0.40
codegen_flags: <defaults>
</compile_context>

<pallas_src>
import numpy as np
import jax
import jax.numpy as jnp
from jax import lax
from jax.experimental import pallas as pl
from jax.experimental.pallas import tpu as pltpu

LIF_VTH = 1.0
LIF_DECAY = 0.25
LIF_THRESH = 0.5                      # torch.gt(mem / V_th, 0.5): strict '>'
FIRE_THRESH = LIF_VTH * LIF_THRESH    # mem / V_th > 0.5  <=>  mem > V_th * 0.5


# ----------------------------- Pallas kernel ---------------------------------

def lif_kernel(x_ref, o_ref):
    """x_ref, o_ref: [T, tr, L] VMEM blocks (one spatial tile, all timesteps)."""
    T = x_ref.shape[0]
    out_dtype = o_ref.dtype
    u0 = jnp.zeros(x_ref.shape[1:], dtype=jnp.float32)

    def step(t, u):
        mem = u * LIF_DECAY + x_ref[t].astype(jnp.float32)
        fired = mem > FIRE_THRESH            # one vcmp
        o_ref[t] = fired.astype(out_dtype)   # streaming lane-dense store
        return jnp.where(fired, 0.0, mem)    # reset-by-zero: one vsel

    if T <= 16:
        u = u0
        for t in range(T):                   # small T: full unroll (LLO visibility)
            u = step(t, u)
    else:
        lax.fori_loop(0, T, step, u0, unroll=4)


# ----------------------------- layout / tiling helpers ------------------------

def _sublane_multiple(itemsize):
    """Sublane packing quantum: 8 for f32, 16 for bf16/f16, 32 for int8."""
    return 8 * max(1, 4 // int(itemsize))


def _choose_layout(n, sub_mult):
    """Pick (R, L, pad): n + pad == R * L, L in {512,256,128}, R % sub_mult == 0.

    Prefer layouts leaving >= 2 row tiles so the grid can feed both TensorCores
    on v7x even for small activations."""
    exact = []
    for lane in (512, 256, 128):
        if n % (sub_mult * lane) == 0:
            exact.append((n // lane, lane))
    for R, lane in exact:
        if R >= 2 * sub_mult:
            return R, lane, 0
    if exact:
        R, lane = exact[0]
        return R, lane, 0
    # TODO(synk): a ragged last tile (pl.BoundedSlice / masked store) would avoid
    # the pad + slice HBM passes for non-divisible shapes.
    lane = 128
    n_pad = ((n + sub_mult * lane - 1) // (sub_mult * lane)) * (sub_mult * lane)
    return n_pad // lane, lane, n_pad - n


def _choose_row_tile(R, T, L, itemsize, sub_mult, budget_bytes=6 * 1024 * 1024):
    """Largest tr dividing R, multiple of sub_mult, within the block budget,
    and (when possible) leaving >= 2 grid tiles for megacore."""
    per_row = T * L * int(itemsize)
    cap = max(sub_mult, (budget_bytes // per_row) // sub_mult * sub_mult)
    if R >= 2 * sub_mult:
        cap = min(cap, max(sub_mult, (R // 2) // sub_mult * sub_mult))
    cap = min(cap, R)
    tr = sub_mult
    for cand in range(cap, sub_mult - 1, -sub_mult):
        if R % cand == 0:
            tr = cand
            break
    return tr


def _vmem_limit_bytes(in_block, out_block, u_block):
    """2x in + 2x out double buffers + u scratch + headroom, clamped to HW."""
    need = 2 * in_block + 2 * out_block + u_block + (2 << 20)
    try:
        cap = int(pltpu.get_tpu_info().vmem_capacity_bytes)
    except Exception:
        cap = 64 << 20                      # conservative (v7x per-TC VMEM)
    hw_cap = cap * 3 // 4                   # ~48 MiB on v7x, ~96 MiB on v5e/v6e
    return int(max(4 << 20, min(need, hw_cap)))


# ----------------------------- wrapper ----------------------------------------

def lif_act(x):
    """LIFAct forward. x: [T, ...] -> spikes [T, ...] (same shape & dtype)."""
    T = x.shape[0]
    lead = x.shape[1:]
    n = int(np.prod(lead))
    itemsize = jnp.dtype(x.dtype).itemsize
    sub_mult = _sublane_multiple(itemsize)

    R, L, pad = _choose_layout(n, sub_mult)
    xf = x.reshape(T, n)                    # reshape is free; no dtype cast here
    if pad:
        xf = jnp.pad(xf, ((0, 0), (0, pad)))   # zero pad -> zero spikes, sliced off
    xf = xf.reshape(T, R, L)

    tr = _choose_row_tile(R, T, L, itemsize, sub_mult)
    grid = (R // tr,)

    in_block = T * tr * L * itemsize
    out_block = T * tr * L * itemsize       # spikes written in input dtype
    u_block = tr * L * 4                    # f32 membrane state
    vmem_limit = _vmem_limit_bytes(in_block, out_block, u_block)

    out = pl.pallas_call(
        lif_kernel,
        out_shape=jax.ShapeDtypeStruct((T, R, L), x.dtype),
        grid_spec=pltpu.PrefetchScalarGridSpec(
            num_scalar_prefetch=0,
            grid=grid,
            in_specs=[pl.BlockSpec((T, tr, L), lambda i: (0, i, 0))],
            out_specs=pl.BlockSpec((T, tr, L), lambda i: (0, i, 0)),
        ),
        compiler_params=pltpu.CompilerParams(
            dimension_semantics=("parallel",),
            vmem_limit_bytes=vmem_limit,
        ),
    )(xf)

    out = out.reshape(T, R * L)
    if pad:
        out = out[:, :n]
    return out.reshape((T,) + lead)


# ----------------------------- pure-JAX reference ------------------------------

def lif_ref(x):
    """Reference forward (same hard-spike semantics) via lax.scan."""
    xf = x.astype(jnp.float32)

    def step(u, xt):
        mem = u * LIF_DECAY + xt
        spike = (mem / LIF_VTH > LIF_THRESH).astype(jnp.float32)
        return mem * (1.0 - spike), spike

    _, out = lax.scan(step, jnp.zeros_like(xf[0]), xf)
    return out.astype(x.dtype)


# TODO(synk): surrogate-gradient (tanh STE) backward of spike_activation is not
# kernelized; this is the forward pass only (matches the PyTorch hard gate).

# ----------------------------- main --------------------------------------------

if __name__ == "__main__":
    # LIFAct(step=T) applied to a time-major activation tensor [T, B, C, H, W].
    T, B, C, H, W = 8, 2, 4, 16, 16
    key = jax.random.PRNGKey(0)
    x = jax.random.normal(key, (T, B, C, H, W), jnp.float32)

    out = jax.block_until_ready(lif_act(x))

    assert out.shape == (T, B, C, H, W), out.shape
    assert out.dtype == x.dtype, out.dtype
    ref = jax.block_until_ready(lif_ref(x))
    np.testing.assert_allclose(np.asarray(out), np.asarray(ref))
    assert bool(jnp.all((out == 0.0) | (out == 1.0)))
    print("KERNEL_OK")
</pallas_src>

<mosaic_0001>
module attributes {stable_mosaic.version = 11 : i64} {
  func.func @lif_kernel(%arg0: i32, %arg1: memref<8x8x128xf32, #tpu.memory_space<vmem>>, %arg2: memref<8x8x128xf32, #tpu.memory_space<vmem>>) attributes {dimension_semantics = [#tpu.dimension_semantics<parallel>], iteration_bounds = array<i64: 2>, scalar_prefetch = 0 : i64, scratch_operands = 0 : i64, tpu.core_type = #tpu.core_type<tc>, window_params = [{transform_indices = @transform_0, window_bounds = array<i64: 8, 8, 128>}, {transform_indices = @transform_1, window_bounds = array<i64: 8, 8, 128>}]} {
    %cst = arith.constant 0.000000e+00 : f32
    %0 = vector.broadcast %cst : f32 to vector<8x128xf32>
    %cst_0 = arith.constant 2.500000e-01 : f32
    %1 = vector.broadcast %cst_0 : f32 to vector<8x128xf32>
    %2 = arith.mulf %0, %1 : vector<8x128xf32>
    %c0 = arith.constant 0 : index
    %c0_1 = arith.constant 0 : index
    %c0_2 = arith.constant 0 : index
    %3 = vector.load %arg1[%c0, %c0_1, %c0_2] : memref<8x8x128xf32, #tpu.memory_space<vmem>>, vector<1x8x128xf32>
    %4 = vector.shape_cast %3 : vector<1x8x128xf32> to vector<8x128xf32>
    %5 = arith.addf %2, %4 : vector<8x128xf32>
    %cst_3 = arith.constant 5.000000e-01 : f32
    %6 = vector.broadcast %cst_3 : f32 to vector<8x128xf32>
    %7 = arith.cmpf ogt, %5, %6 : vector<8x128xf32>
    %8 = arith.extui %7 : vector<8x128xi1> to vector<8x128xi32>
    %9 = arith.sitofp %8 : vector<8x128xi32> to vector<8x128xf32>
    %c0_4 = arith.constant 0 : index
    %c0_5 = arith.constant 0 : index
    %c0_6 = arith.constant 0 : index
    %10 = vector.load %arg2[%c0_4, %c0_5, %c0_6] : memref<8x8x128xf32, #tpu.memory_space<vmem>>, vector<1x8x128xf32>
    %11 = vector.shape_cast %10 : vector<1x8x128xf32> to vector<8x128xf32>
    %12 = vector.shape_cast %9 : vector<8x128xf32> to vector<1x8x128xf32>
    tpu.vector_store %arg2[%c0_4, %c0_5, %c0_6], %12 {strides = array<i32>} : memref<8x8x128xf32, #tpu.memory_space<vmem>>, vector<1x8x128xf32>,
    %cst_7 = arith.constant 0.000000e+00 : f32
    %13 = vector.broadcast %cst_7 : f32 to vector<8x128xf32>
    %14 = arith.select %7, %13, %5 : vector<8x128xi1>, vector<8x128xf32>
    %cst_8 = arith.constant 2.500000e-01 : f32
    %15 = vector.broadcast %cst_8 : f32 to vector<8x128xf32>
    %16 = arith.mulf %14, %15 : vector<8x128xf32>
    %c1 = arith.constant 1 : index
    %c0_9 = arith.constant 0 : index
    %c0_10 = arith.constant 0 : index
    %17 = vector.load %arg1[%c1, %c0_9, %c0_10] : memref<8x8x128xf32, #tpu.memory_space<vmem>>, vector<1x8x128xf32>
    %18 = vector.shape_cast %17 : vector<1x8x128xf32> to vector<8x128xf32>
    %19 = arith.addf %16, %18 : vector<8x128xf32>
    %cst_11 = arith.constant 5.000000e-01 : f32
    %20 = vector.broadcast %cst_11 : f32 to vector<8x128xf32>
    %21 = arith.cmpf ogt, %19, %20 : vector<8x128xf32>
    %22 = arith.extui %21 : vector<8x128xi1> to vector<8x128xi32>
    %23 = arith.sitofp %22 : vector<8x128xi32> to vector<8x128xf32>
    %c1_12 = arith.constant 1 : index
    %c0_13 = arith.constant 0 : index
    %c0_14 = arith.constant 0 : index
    %24 = vector.load %arg2[%c1_12, %c0_13, %c0_14] : memref<8x8x128xf32, #tpu.memory_space<vmem>>, vector<1x8x128xf32>
    %25 = vector.shape_cast %24 : vector<1x8x128xf32> to vector<8x128xf32>
    %26 = vector.shape_cast %23 : vector<8x128xf32> to vector<1x8x128xf32>
    tpu.vector_store %arg2[%c1_12, %c0_13, %c0_14], %26 {strides = array<i32>} : memref<8x8x128xf32, #tpu.memory_space<vmem>>, vector<1x8x128xf32>,
    %cst_15 = arith.constant 0.000000e+00 : f32
    %27 = vector.broadcast %cst_15 : f32 to vector<8x128xf32>
    %28 = arith.select %21, %27, %19 : vector<8x128xi1>, vector<8x128xf32>
    %cst_16 = arith.constant 2.500000e-01 : f32
    %29 = vector.broadcast %cst_16 : f32 to vector<8x128xf32>
    %30 = arith.mulf %28, %29 : vector<8x128xf32>
    %c2 = arith.constant 2 : index
    %c0_17 = arith.constant 0 : index
    %c0_18 = arith.constant 0 : index
    %31 = vector.load %arg1[%c2, %c0_17, %c0_18] : memref<8x8x128xf32, #tpu.memory_space<vmem>>, vector<1x8x128xf32>
    %32 = vector.shape_cast %31 : vector<1x8x128xf32> to vector<8x128xf32>
    %33 = arith.addf %30, %32 : vector<8x128xf32>
    %cst_19 = arith.constant 5.000000e-01 : f32
    %34 = vector.broadcast %cst_19 : f32 to vector<8x128xf32>
    %35 = arith.cmpf ogt, %33, %34 : vector<8x128xf32>
    %36 = arith.extui %35 : vector<8x128xi1> to vector<8x128xi32>
    %37 = arith.sitofp %36 : vector<8x128xi32> to vector<8x128xf32>
    %c2_20 = arith.constant 2 : index
    %c0_21 = arith.constant 0 : index
    %c0_22 = arith.constant 0 : index
    %38 = vector.load %arg2[%c2_20, %c0_21, %c0_22] : memref<8x8x128xf32, #tpu.memory_space<vmem>>, vector<1x8x128xf32>
    %39 = vector.shape_cast %38 : vector<1x8x128xf32> to vector<8x128xf32>
    %40 = vector.shape_cast %37 : vector<8x128xf32> to vector<1x8x128xf32>
    tpu.vector_store %arg2[%c2_20, %c0_21, %c0_22], %40 {strides = array<i32>} : memref<8x8x128xf32, #tpu.memory_space<vmem>>, vector<1x8x128xf32>,
    %cst_23 = arith.constant 0.000000e+00 : f32
    %41 = vector.broadcast %cst_23 : f32 to vector<8x128xf32>
    %42 = arith.select %35, %41, %33 : vector<8x128xi1>, vector<8x128xf32>
    %cst_24 = arith.constant 2.500000e-01 : f32
    %43 = vector.broadcast %cst_24 : f32 to vector<8x128xf32>
    %44 = arith.mulf %42, %43 : vector<8x128xf32>
    %c3 = arith.constant 3 : index
    %c0_25 = arith.constant 0 : index
    %c0_26 = arith.constant 0 : index
    %45 = vector.load %arg1[%c3, %c0_25, %c0_26] : memref<8x8x128xf32, #tpu.memory_space<vmem>>, vector<1x8x128xf32>
    %46 = vector.shape_cast %45 : vector<1x8x128xf32> to vector<8x128xf32>
    %47 = arith.addf %44, %46 : vector<8x128xf32>
    %cst_27 = arith.constant 5.000000e-01 : f32
    %48 = vector.broadcast %cst_27 : f32 to vector<8x128xf32>
    %49 = arith.cmpf ogt, %47, %48 : vector<8x128xf32>
    %50 = arith.extui %49 : vector<8x128xi1> to vector<8x128xi32>
    %51 = arith.sitofp %50 : vector<8x128xi32> to vector<8x128xf32>
    %c3_28 = arith.constant 3 : index
    %c0_29 = arith.constant 0 : index
    %c0_30 = arith.constant 0 : index
    %52 = vector.load %arg2[%c3_28, %c0_29, %c0_30] : memref<8x8x128xf32, #tpu.memory_space<vmem>>, vector<1x8x128xf32>
    %53 = vector.shape_cast %52 : vector<1x8x128xf32> to vector<8x128xf32>
    %54 = vector.shape_cast %51 : vector<8x128xf32> to vector<1x8x128xf32>
    tpu.vector_store %arg2[%c3_28, %c0_29, %c0_30], %54 {strides = array<i32>} : memref<8x8x128xf32, #tpu.memory_space<vmem>>, vector<1x8x128xf32>,
    %cst_31 = arith.constant 0.000000e+00 : f32
    %55 = vector.broadcast %cst_31 : f32 to vector<8x128xf32>
    %56 = arith.select %49, %55, %47 : vector<8x128xi1>, vector<8x128xf32>
    %cst_32 = arith.constant 2.500000e-01 : f32
    %57 = vector.broadcast %cst_32 : f32 to vector<8x128xf32>
    %58 = arith.mulf %56, %57 : vector<8x128xf32>
    %c4 = arith.constant 4 : index
    %c0_33 = arith.constant 0 : index
    %c0_34 = arith.constant 0 : index
    %59 = vector.load %arg1[%c4, %c0_33, %c0_34] : memref<8x8x128xf32, #tpu.memory_space<vmem>>, vector<1x8x128xf32>
    %60 = vector.shape_cast %59 : vector<1x8x128xf32> to vector<8x128xf32>
    %61 = arith.addf %58, %60 : vector<8x128xf32>
    %cst_35 = arith.constant 5.000000e-01 : f32
    %62 = vector.broadcast %cst_35 : f32 to vector<8x128xf32>
    %63 = arith.cmpf ogt, %61, %62 : vector<8x128xf32>
    %64 = arith.extui %63 : vector<8x128xi1> to vector<8x128xi32>
    %65 = arith.sitofp %64 : vector<8x128xi32> to vector<8x128xf32>
    %c4_36 = arith.constant 4 : index
    %c0_37 = arith.constant 0 : index
    %c0_38 = arith.constant 0 : index
    %66 = vector.load %arg2[%c4_36, %c0_37, %c0_38] : memref<8x8x128xf32, #tpu.memory_space<vmem>>, vector<1x8x128xf32>
    %67 = vector.shape_cast %66 : vector<1x8x128xf32> to vector<8x128xf32>
    %68 = vector.shape_cast %65 : vector<8x128xf32> to vector<1x8x128xf32>
    tpu.vector_store %arg2[%c4_36, %c0_37, %c0_38], %68 {strides = array<i32>} : memref<8x8x128xf32, #tpu.memory_space<vmem>>, vector<1x8x128xf32>,
    %cst_39 = arith.constant 0.000000e+00 : f32
    %69 = vector.broadcast %cst_39 : f32 to vector<8x128xf32>
    %70 = arith.select %63, %69, %61 : vector<8x128xi1>, vector<8x128xf32>
    %cst_40 = arith.constant 2.500000e-01 : f32
    %71 = vector.broadcast %cst_40 : f32 to vector<8x128xf32>
    %72 = arith.mulf %70, %71 : vector<8x128xf32>
    %c5 = arith.constant 5 : index
    %c0_41 = arith.constant 0 : index
    %c0_42 = arith.constant 0 : index
    %73 = vector.load %arg1[%c5, %c0_41, %c0_42] : memref<8x8x128xf32, #tpu.memory_space<vmem>>, vector<1x8x128xf32>
    %74 = vector.shape_cast %73 : vector<1x8x128xf32> to vector<8x128xf32>
    %75 = arith.addf %72, %74 : vector<8x128xf32>
    %cst_43 = arith.constant 5.000000e-01 : f32
    %76 = vector.broadcast %cst_43 : f32 to vector<8x128xf32>
    %77 = arith.cmpf ogt, %75, %76 : vector<8x128xf32>
    %78 = arith.extui %77 : vector<8x128xi1> to vector<8x128xi32>
    %79 = arith.sitofp %78 : vector<8x128xi32> to vector<8x128xf32>
    %c5_44 = arith.constant 5 : index
    %c0_45 = arith.constant 0 : index
    %c0_46 = arith.constant 0 : index
    %80 = vector.load %arg2[%c5_44, %c0_45, %c0_46] : memref<8x8x128xf32, #tpu.memory_space<vmem>>, vector<1x8x128xf32>
    %81 = vector.shape_cast %80 : vector<1x8x128xf32> to vector<8x128xf32>
    %82 = vector.shape_cast %79 : vector<8x128xf32> to vector<1x8x128xf32>
    tpu.vector_store %arg2[%c5_44, %c0_45, %c0_46], %82 {strides = array<i32>} : memref<8x8x128xf32, #tpu.memory_space<vmem>>, vector<1x8x128xf32>,
    %cst_47 = arith.constant 0.000000e+00 : f32
    %83 = vector.broadcast %cst_47 : f32 to vector<8x128xf32>
    %84 = arith.select %77, %83, %75 : vector<8x128xi1>, vector<8x128xf32>
    %cst_48 = arith.constant 2.500000e-01 : f32
    %85 = vector.broadcast %cst_48 : f32 to vector<8x128xf32>
    %86 = arith.mulf %84, %85 : vector<8x128xf32>
    %c6 = arith.constant 6 : index
    %c0_49 = arith.constant 0 : index
    %c0_50 = arith.constant 0 : index
    %87 = vector.load %arg1[%c6, %c0_49, %c0_50] : memref<8x8x128xf32, #tpu.memory_space<vmem>>, vector<1x8x128xf32>
    %88 = vector.shape_cast %87 : vector<1x8x128xf32> to vector<8x128xf32>
    %89 = arith.addf %86, %88 : vector<8x128xf32>
    %cst_51 = arith.constant 5.000000e-01 : f32
    %90 = vector.broadcast %cst_51 : f32 to vector<8x128xf32>
    %91 = arith.cmpf ogt, %89, %90 : vector<8x128xf32>
    %92 = arith.extui %91 : vector<8x128xi1> to vector<8x128xi32>
    %93 = arith.sitofp %92 : vector<8x128xi32> to vector<8x128xf32>
    %c6_52 = arith.constant 6 : index
    %c0_53 = arith.constant 0 : index
    %c0_54 = arith.constant 0 : index
    %94 = vector.load %arg2[%c6_52, %c0_53, %c0_54] : memref<8x8x128xf32, #tpu.memory_space<vmem>>, vector<1x8x128xf32>
    %95 = vector.shape_cast %94 : vector<1x8x128xf32> to vector<8x128xf32>
    %96 = vector.shape_cast %93 : vector<8x128xf32> to vector<1x8x128xf32>
    tpu.vector_store %arg2[%c6_52, %c0_53, %c0_54], %96 {strides = array<i32>} : memref<8x8x128xf32, #tpu.memory_space<vmem>>, vector<1x8x128xf32>,
    %cst_55 = arith.constant 0.000000e+00 : f32
    %97 = vector.broadcast %cst_55 : f32 to vector<8x128xf32>
    %98 = arith.select %91, %97, %89 : vector<8x128xi1>, vector<8x128xf32>
    %cst_56 = arith.constant 2.500000e-01 : f32
    %99 = vector.broadcast %cst_56 : f32 to vector<8x128xf32>
    %100 = arith.mulf %98, %99 : vector<8x128xf32>
    %c7 = arith.constant 7 : index
    %c0_57 = arith.constant 0 : index
    %c0_58 = arith.constant 0 : index
    %101 = vector.load %arg1[%c7, %c0_57, %c0_58] : memref<8x8x128xf32, #tpu.memory_space<vmem>>, vector<1x8x128xf32>
    %102 = vector.shape_cast %101 : vector<1x8x128xf32> to vector<8x128xf32>
    %103 = arith.addf %100, %102 : vector<8x128xf32>
    %cst_59 = arith.constant 5.000000e-01 : f32
    %104 = vector.broadcast %cst_59 : f32 to vector<8x128xf32>
    %105 = arith.cmpf ogt, %103, %104 : vector<8x128xf32>
    %106 = arith.extui %105 : vector<8x128xi1> to vector<8x128xi32>
    %107 = arith.sitofp %106 : vector<8x128xi32> to vector<8x128xf32>
    %c7_60 = arith.constant 7 : index
    %c0_61 = arith.constant 0 : index
    %c0_62 = arith.constant 0 : index
    %108 = vector.load %arg2[%c7_60, %c0_61, %c0_62] : memref<8x8x128xf32, #tpu.memory_space<vmem>>, vector<1x8x128xf32>
    %109 = vector.shape_cast %108 : vector<1x8x128xf32> to vector<8x128xf32>
    %110 = vector.shape_cast %107 : vector<8x128xf32> to vector<1x8x128xf32>
    tpu.vector_store %arg2[%c7_60, %c0_61, %c0_62], %110 {strides = array<i32>} : memref<8x8x128xf32, #tpu.memory_space<vmem>>, vector<1x8x128xf32>,
    return
  }
  func.func @transform_0(%arg0: i32) -> (i32, i32, i32) {
    %c0_i32 = arith.constant 0 : i32
    %c0_i32_0 = arith.constant 0 : i32
    %c0_i32_1 = arith.constant 0 : i32
    return %c0_i32, %arg0, %c0_i32_0 : i32, i32, i32
  }
  func.func @transform_1(%arg0: i32) -> (i32, i32, i32) {
    %c0_i32 = arith.constant 0 : i32
    %c0_i32_0 = arith.constant 0 : i32
    %c0_i32_1 = arith.constant 0 : i32
    return %c0_i32, %arg0, %c0_i32_0 : i32, i32, i32
  }
}

</mosaic_0001>

<llo_original>
// kernel: tpu_custom_call.1
$region0: #{tpu_custom_call.1}
  #allocation0 [shape = 'u32[]', space=smem, size = 0x4, offset = 0x4, fixed_abs, tag = 'smem constant byte address 0x4 - core index']
  #allocation1 [shape = 'u32[144,128]{1,0:T(1,128)}', space=vmem, size = 0x12000, scoped, tag = 'internal scratch']
  %s0 = inlined_call_operand.hbm [shape: f32[8,16,128], index: 0, kind: input, shape index: {}]
  %s1 = inlined_call_operand.hbm [shape: f32[8,16,128], index: 1, kind: output, shape index: {}]
  %s2 = sld [smem:[#allocation0]]
  $region41: #{tpu_custom_call.1} parent=0
    _
  %s4 = ssub.s32 1, %s2
  %s5 = scalar_select 0, %s4, %s2
  $region1: #{tpu_custom_call.1} parent=0
    #allocation2 [shape = 'u8[65536]{0}', space=vmem, size = 0x10000, scoped, tag = 'input window, operand 0']
    #allocation3 [shape = 's32[2]{0}', space=sflag, size = 0x8, scoped, tag = 'scoped memory for tpu_custom_call.1']
    #allocation4 [shape = 's32[2]{0}', space=sflag, size = 0x8, scoped, tag = 'scoped memory for tpu_custom_call.1']
    #allocation5 [shape = 'u8[65536]{0}', space=vmem, size = 0x10000, scoped, tag = 'output window, operand 0']
    %6 = vsyncpa [#allocation3], 0
    %s7 = scalar_lea.sflag [#allocation3], 1
    %8 = vsyncpa %s7, 0
    %9 = vsyncpa [#allocation4], 0
    %s10 = scalar_lea.sflag [#allocation4], 1
    %11 = vsyncpa %s10, 0
    loop: start=0, step=1, limit=4
    $region2: #{tpu_custom_call.1} parent=1 // loop_pre_header
      _
    $region3: #{tpu_custom_call.1} parent=1 // loop_header
      %s13 = sphi 0, %s17
      %p14 = scmp.ge.s32.totalorder %s13, 4
      %s23 = sphi 0, %s25
      %s26 = sphi 0, %s23
      %s27 = sphi 0, %s26
      %s43 = sphi 0, %s27
      %s49 = sphi 0, %s51
      %s52 = sphi 0, %s49
      %s53 = sphi 0, %s52
      %s69 = sphi 0, %s53
    $region4: #{tpu_custom_call.1} parent=1 // loop_header_branch
      %16 = sbr.rel (%p14) target = $region8
    $region5: #{tpu_custom_call.1} parent=1 // loop_body
      %s18 = ssub.s32 %s13, 1
      %s19 = ssub.s32 %s13, 2
      %s20 = sadd.s32 %s13, 1
      %s21 = ssub.s32 %s13, %s20
      %p22 = scmp.eq.s32.totalorder %s21, 0
      %s24 = sadd.s32 %s23, 1
      %s25 = scalar_select %p22, %s23, %s24
      %p28 = pneg %p22
      %p29 = scmp.eq.s32.totalorder %s13, 1
      %p30 = por %p28, %p29
      %p31 = scmp.ne.s32.totalorder %s23, %s26
      %p32 = scmp.eq.s32.totalorder %s13, 0
      %p33 = por %p31, %p32
      %p34 = scmp.ne.s32.totalorder %s23, %s26
      %p35 = scmp.eq.s32.totalorder %s18, 1
      %p36 = por %p34, %p35
      %p37 = scmp.ne.s32.totalorder %s26, %s27
      %p38 = scmp.eq.s32.totalorder %s18, 0
      %p39 = por %p37, %p38
      %p40 = scmp.ne.s32.totalorder %s26, %s27
      %p41 = scmp.eq.s32.totalorder %s19, 1
      %p42 = por %p40, %p41
      %p44 = scmp.ne.s32.totalorder %s27, %s43
      %p45 = scmp.eq.s32.totalorder %s19, 0
      %p46 = por %p44, %p45
      %s47 = ssub.s32 %s13, %s20
      %p48 = scmp.eq.s32.totalorder %s47, 0
      %s50 = sadd.s32 %s49, 1
      %s51 = scalar_select %p48, %s49, %s50
      %p54 = pneg %p48
      %p55 = scmp.eq.s32.totalorder %s13, 1
      %p56 = por %p54, %p55
      %p57 = scmp.ne.s32.totalorder %s49, %s52
      %p58 = scmp.eq.s32.totalorder %s13, 0
      %p59 = por %p57, %p58
      %p60 = scmp.ne.s32.totalorder %s49, %s52
      %p61 = scmp.eq.s32.totalorder %s18, 1
      %p62 = por %p60, %p61
      %p63 = scmp.ne.s32.totalorder %s52, %s53
      %p64 = scmp.eq.s32.totalorder %s18, 0
      %p65 = por %p63, %p64
      %p66 = scmp.ne.s32.totalorder %s52, %s53
      %p67 = scmp.eq.s32.totalorder %s19, 1
      %p68 = por %p66, %p67
      %p70 = scmp.ne.s32.totalorder %s53, %s69
      %p71 = scmp.eq.s32.totalorder %s19, 0
      %p72 = por %p70, %p71
      %p73 = scmp.le.s32.totalorder 1, %s13
      %p74 = scmp.lt.s32.totalorder %s13, 3
      %p75 = pnand %p73, %p74
      %p76 = pneg %p75
      // Predicated region
      $region9: #{tpu_custom_call.1} parent=5 // pred_check
        _
      $region10: #{tpu_custom_call.1} parent=5 // pred_check_branch
        %78 = sbr.rel (%p75) target = $region12
      $region11: #{tpu_custom_call.1} parent=5 // pred_region
        %s79 = ssub.s32 %s13, 1
      $region12: #{tpu_custom_call.1} parent=5 // pred_fallthru
        _
      %p80 = scmp.lt.s32.totalorder %s13, 2
      // Predicated region
      $region13: #{tpu_custom_call.1} parent=5 // pred_check
        %p81 = pneg %p80
      $region14: #{tpu_custom_call.1} parent=5 // pred_check_branch
        %83 = sbr.rel (%p81) target = $region16
      $region15: #{tpu_custom_call.1} parent=5 // pred_region
        // Predicated region
        $region17: #{tpu_custom_call.1} parent=15 // pred_check
          %p84 = pneg %p33
        $region18: #{tpu_custom_call.1} parent=15 // pred_check_branch
          %86 = sbr.rel (%p84) target = $region20
        $region19: #{tpu_custom_call.1} parent=15 // pred_region
          %s87 = sand.u32 %s23, 1
          %s88 = scalar_lea.sflag [#allocation3], %s87
          %s89 = sand.u32 %s23, 1
          %s90 = smul.addr %s89, 64
          %s91 = scalar_lea.vmem [#allocation2], %s90
          %s93 = ssub.s32 1024, 1024
          %94 = vsyncadd %s88, %s93
          %s95 = smul.addr %s13, 128
          %s96 = scalar_lea.hbm %s0, %s95
          %s97 = sshll.u32 %s91, 4
          %s98 = int_to_ptr.vmem [resolvable:$true] %s97
          %103 = dma.hbm_to_vmem [thread:$0]  %s96, 1024, %s98, %s88, 256, 128, 8
        $region20: #{tpu_custom_call.1} parent=15 // pred_fallthru
          _
      $region16: #{tpu_custom_call.1} parent=5 // pred_fallthru
        _
      %p104 = scmp.le.s32.totalorder 1, %s13
      %p105 = scmp.lt.s32.totalorder %s13, 3
      %p106 = pnand %p104, %p105
      %p107 = pneg %p106
      // Predicated region
      $region21: #{tpu_custom_call.1} parent=5 // pred_check
        _
      $region22: #{tpu_custom_call.1} parent=5 // pred_check_branch
        %109 = sbr.rel (%p106) target = $region24
      $region23: #{tpu_custom_call.1} parent=5 // pred_region
        %s110 = ssub.s32 %s13, 1
        %s111 = sand.u32 %s26, 1
        %s112 = scalar_lea.sflag [#allocation3], %s111
        %s113 = sand.u32 %s26, 1
        %s114 = smul.addr %s113, 64
        %s115 = scalar_lea.vmem [#allocation2], %s114
        // Predicated region
        $region25: #{tpu_custom_call.1} parent=23 // pred_check
          %p116 = pneg %p39
        $region26: #{tpu_custom_call.1} parent=23 // pred_check_branch
          %118 = sbr.rel (%p116) target = $region28
        $region27: #{tpu_custom_call.1} parent=23 // pred_region
          %119 = dma.done %s112, 1024
        $region28: #{tpu_custom_call.1} parent=23 // pred_fallthru
          _
        %s120 = sand.u32 %s26, 1
        %s121 = scalar_lea.sflag [#allocation3], %s120
        %s122 = sand.u32 %s26, 1
        %s123 = smul.addr %s122, 64
        %s124 = scalar_lea.vmem [#allocation2], %s123
        %p125 = pneg %p39
        %p126 = pneg %p36
        %p127 = pneg %p65
        %p128 = pneg %p62
        %s129 = sand.u32 %s52, 1
        %s130 = scalar_lea.sflag [#allocation4], %s129
        %s131 = sand.u32 %s52, 1
        %s132 = smul.addr %s131, 64
        %s133 = scalar_lea.vmem [#allocation5], %s132
        %v134 = vld [vmem:[%s115] sm:$0xff]
        %v135 = vadd.f32 %v134, 0.0
        %vm136 = vcmp.gt.f32.partialorder %v135, 0.5
        %v137 = vsel %vm136, 1, 0
        %v138 = vcvt.s32.f32 %v137
        %139 = vst [vmem:[%s133] sm:$0xff] %v138
        %v140 = vsel %vm136, 0.0, %v135
        %v141 = vmul.f32 %v140, 0.25
        %s142 = scalar_lea.vmem %s115, 8 [#allocation2]
        %v143 = vld [vmem:[%s142] sm:$0xff]
        %v144 = vadd.f32 %v141, %v143
        %vm145 = vcmp.gt.f32.partialorder %v144, 0.5
        %v146 = vsel %vm145, 1, 0
        %v147 = vcvt.s32.f32 %v146
        %s148 = scalar_lea.vmem %s133, 8 [#allocation5]
        %149 = vst [vmem:[%s148] sm:$0xff] %v147
        %v150 = vsel %vm145, 0.0, %v144
        %v151 = vmul.f32 %v150, 0.25
        %s152 = scalar_lea.vmem %s115, 16 [#allocation2]
        %v153 = vld [vmem:[%s152] sm:$0xff]
        %v154 = vadd.f32 %v151, %v153
        %vm155 = vcmp.gt.f32.partialorder %v154, 0.5
        %v156 = vsel %vm155, 1, 0
        %v157 = vcvt.s32.f32 %v156
        %s158 = scalar_lea.vmem %s133, 16 [#allocation5]
        %159 = vst [vmem:[%s158] sm:$0xff] %v157
        %v160 = vsel %vm155, 0.0, %v154
        %v161 = vmul.f32 %v160, 0.25
        %s162 = scalar_lea.vmem %s115, 24 [#allocation2]
        %v163 = vld [vmem:[%s162] sm:$0xff]
        %v164 = vadd.f32 %v161, %v163
        %vm165 = vcmp.gt.f32.partialorder %v164, 0.5
        %v166 = vsel %vm165, 1, 0
        %v167 = vcvt.s32.f32 %v166
        %s168 = scalar_lea.vmem %s133, 24 [#allocation5]
        %169 = vst [vmem:[%s168] sm:$0xff] %v167
        %v170 = vsel %vm165, 0.0, %v164
        %v171 = vmul.f32 %v170, 0.25
        %s172 = scalar_lea.vmem %s115, 32 [#allocation2]
        %v173 = vld [vmem:[%s172] sm:$0xff]
        %v174 = vadd.f32 %v171, %v173
        %vm175 = vcmp.gt.f32.partialorder %v174, 0.5
        %v176 = vsel %vm175, 1, 0
        %v177 = vcvt.s32.f32 %v176
        %s178 = scalar_lea.vmem %s133, 32 [#allocation5]
        %179 = vst [vmem:[%s178] sm:$0xff] %v177
        %v180 = vsel %vm175, 0.0, %v174
        %v181 = vmul.f32 %v180, 0.25
        %s182 = scalar_lea.vmem %s115, 40 [#allocation2]
        %v183 = vld [vmem:[%s182] sm:$0xff]
        %v184 = vadd.f32 %v181, %v183
        %vm185 = vcmp.gt.f32.partialorder %v184, 0.5
        %v186 = vsel %vm185, 1, 0
        %v187 = vcvt.s32.f32 %v186
        %s188 = scalar_lea.vmem %s133, 40 [#allocation5]
        %189 = vst [vmem:[%s188] sm:$0xff] %v187
        %v190 = vsel %vm185, 0.0, %v184
        %v191 = vmul.f32 %v190, 0.25
        %s192 = scalar_lea.vmem %s115, 48 [#allocation2]
        %v193 = vld [vmem:[%s192] sm:$0xff]
        %v194 = vadd.f32 %v191, %v193
        %vm195 = vcmp.gt.f32.partialorder %v194, 0.5
        %v196 = vsel %vm195, 1, 0
        %v197 = vcvt.s32.f32 %v196
        %s198 = scalar_lea.vmem %s133, 48 [#allocation5]
        %199 = vst [vmem:[%s198] sm:$0xff] %v197
        %v200 = vsel %vm195, 0.0, %v194
        %v201 = vmul.f32 %v200, 0.25
        %s202 = scalar_lea.vmem %s115, 56 [#allocation2]
        %v203 = vld [vmem:[%s202] sm:$0xff]
        %v204 = vadd.f32 %v201, %v203
        %vm205 = vcmp.gt.f32.partialorder %v204, 0.5
        %v206 = vsel %vm205, 1, 0
        %v207 = vcvt.s32.f32 %v206
        %s208 = scalar_lea.vmem %s133, 56 [#allocation5]
        %209 = vst [vmem:[%s208] sm:$0xff] %v207
        %s210 = sand.u32 %s52, 1
        %s211 = scalar_lea.sflag [#allocation4], %s210
        %s212 = sand.u32 %s52, 1
        %s213 = smul.addr %s212, 64
        %s214 = scalar_lea.vmem [#allocation5], %s213
        // Predicated region
        $region29: #{tpu_custom_call.1} parent=23 // pred_check
          %p215 = pneg %p62
        $region30: #{tpu_custom_call.1} parent=23 // pred_check_branch
          %217 = sbr.rel (%p215) target = $region32
        $region31: #{tpu_custom_call.1} parent=23 // pred_region
          %s219 = ssub.s32 1024, 1024
          %220 = vsyncadd %s211, %s219
          %s221 = smul.addr %s18, 128
          %s222 = scalar_lea.hbm %s1, %s221
          %s223 = sshll.u32 %s214, 4
          %s224 = int_to_ptr.vmem [resolvable:$true] %s223
          %229 = dma.vmem_to_hbm [thread:$0]  %s224, 1024, %s222, %s211, 128, 256, 8
        $region32: #{tpu_custom_call.1} parent=23 // pred_fallthru
          _
      $region24: #{tpu_custom_call.1} parent=5 // pred_fallthru
        _
      %p230 = scmp.le.s32.totalorder 2, %s13
      // Predicated region
      $region33: #{tpu_custom_call.1} parent=5 // pred_check
        %p231 = pneg %p230
      $region34: #{tpu_custom_call.1} parent=5 // pred_check_branch
        %233 = sbr.rel (%p231) target = $region36
      $region35: #{tpu_custom_call.1} parent=5 // pred_region
        %s234 = ssub.s32 %s13, 2
        // Predicated region
        $region37: #{tpu_custom_call.1} parent=35 // pred_check
          %p235 = pneg %p68
        $region38: #{tpu_custom_call.1} parent=35 // pred_check_branch
          %237 = sbr.rel (%p235) target = $region40
        $region39: #{tpu_custom_call.1} parent=35 // pred_region
          %s238 = sand.u32 %s53, 1
          %s239 = scalar_lea.sflag [#allocation4], %s238
          %s240 = sand.u32 %s53, 1
          %s241 = smul.addr %s240, 64
          %s242 = scalar_lea.vmem [#allocation5], %s241
          %243 = dma.done %s239, 1024
        $region40: #{tpu_custom_call.1} parent=35 // pred_fallthru
          _
      $region36: #{tpu_custom_call.1} parent=5 // pred_fallthru
        _
    $region6: #{tpu_custom_call.1} parent=1 // loop_footer
      %s17 = sadd.s32 1, %s13
    $region7: #{tpu_custom_call.1} parent=1 // loop_footer_branch
      %12 = sbr.rel target = $region3
    $region8: #{tpu_custom_call.1} parent=1 // loop_exit
      _
    %244 = vsyncpa [#allocation3], 1
    %s245 = scalar_lea.sflag [#allocation3], 1
    %246 = vsyncpa %s245, 1
    %247 = vsyncpa [#allocation4], 1
    %s248 = scalar_lea.sflag [#allocation4], 1
    %249 = vsyncpa %s248, 1

</llo_original>
